<compile_context>
chip_gen: v7x
topology: tpu7x:2x2x1
jax: 0.10.0
libtpu: 0.0.40
codegen_flags: <defaults>
</compile_context>

<pallas_src>
import jax
import jax.numpy as jnp
from jax.experimental import pallas as pl
from jax.experimental.pallas import tpu as pltpu

LANE = 128


def _round_up(n, m):
    return (n + m - 1) // m * m


def _pad2d(a, rows, cols, dtype):
    out = jnp.zeros((rows, cols), dtype)
    return out.at[: a.shape[0], : a.shape[1]].set(a.astype(dtype))


def _edge_mlp_kernel(x_ref, w1_ref, b1_ref, w2_ref, b2_ref,
                     w3_ref, b3_ref, w4_ref, b4_ref, o_ref):
    """Fused EdgeMLP forward for one row tile.

    x_ref : [tm, f_in]      f32 (unpadded features; cast to bf16 in-kernel)
    w1_ref: [f_in, 128]     bf16 (lin1.weight.T, N zero-padded to 128)
    w2_ref, w3_ref: [128,128] bf16 (zero-padded)
    b1/b2/b3_ref: [1, 128]  f32 (zero-padded)
    w4_ref: [1, 128]        f32 (lin4.weight.T row, zero-padded; used on VPU)
    b4_ref: [1, 128]        f32 (scalar bias broadcast to all lanes)
    o_ref : [1, tm//128, 128] f32 packed logits (row r*128+c of the tile -> [0,r,c])
    """
    # TODO(synk): Dropout(p=0.2) layers are identity at inference; training-mode
    # stochastic dropout is not implemented.
    x = x_ref[...].astype(jnp.bfloat16)                                 # [tm, f_in]
    h = jnp.dot(x, w1_ref[...], preferred_element_type=jnp.float32) + b1_ref[...]
    h = jnp.maximum(h, 0.0)
    h = jnp.dot(h.astype(jnp.bfloat16), w2_ref[...],
                preferred_element_type=jnp.float32) + b2_ref[...]
    h = jnp.maximum(h, 0.0)
    z = jnp.dot(h.astype(jnp.bfloat16), w3_ref[...],
                preferred_element_type=jnp.float32) + b3_ref[...]
    zr = jnp.maximum(z, 0.0)                                            # [tm, 128]

    # Final 16->1 layer on VPU (mul) + XLU (cross-lane sum) -> packed logits.
    tm = zr.shape[0]
    groups = tm // LANE
    prod = zr * w4_ref[...]                                             # [tm, 128] f32
    y = jnp.sum(prod.reshape(groups, LANE, LANE), axis=-1)              # [groups, 128]
    y = y + b4_ref[...]                                                 # scalar bias
    o_ref[0] = y.astype(o_ref.dtype)


def prepare_params(params):
    """One-time padding / dtype conversion of the EdgeMLP parameters."""
    f_in = params["w1"].shape[0]
    return {
        "w1": _pad2d(params["w1"], f_in, LANE, jnp.bfloat16),   # K kept unpadded
        "b1": _pad2d(params["b1"], 1, LANE, jnp.float32),
        "w2": _pad2d(params["w2"], LANE, LANE, jnp.bfloat16),
        "b2": _pad2d(params["b2"], 1, LANE, jnp.float32),
        "w3": _pad2d(params["w3"], LANE, LANE, jnp.bfloat16),
        "b3": _pad2d(params["b3"], 1, LANE, jnp.float32),
        # Final 16->1 layer is evaluated on the VPU: keep it as an f32 lane row.
        "w4": _pad2d(params["w4"].T, 1, LANE, jnp.float32),
        "b4": jnp.full((1, LANE), params["b4"].reshape(()), jnp.float32),
    }


def _choose_tm(batch):
    """Row-tile size: large (HBM roofline) but >=2 grid steps when possible."""
    b128 = _round_up(batch, LANE)
    return max(LANE, min(2048, (b128 // (2 * LANE)) * LANE))


def edge_mlp_forward(x, prepared, *, tm=None):
    """Pallas EdgeMLP.forward.  x: [B, input_dim] f32 -> [B, 1] f32 logits."""
    b, f_in = x.shape
    assert prepared["w1"].shape[0] == f_in

    if tm is None:
        tm = _choose_tm(b)
    b_pad = _round_up(b, tm)

    xp = x.astype(jnp.float32)
    if b_pad != b:
        xp = jnp.zeros((b_pad, f_in), jnp.float32).at[:b].set(xp)

    groups = tm // LANE
    n_tiles = b_pad // tm
    const = lambda i: (0, 0)

    out = pl.pallas_call(
        _edge_mlp_kernel,
        out_shape=jax.ShapeDtypeStruct((n_tiles, groups, LANE), jnp.float32),
        grid_spec=pltpu.PrefetchScalarGridSpec(
            num_scalar_prefetch=0,
            grid=(n_tiles,),
            in_specs=[
                pl.BlockSpec((tm, f_in), lambda i: (i, 0)),
                pl.BlockSpec((f_in, LANE), const), pl.BlockSpec((1, LANE), const),
                pl.BlockSpec((LANE, LANE), const), pl.BlockSpec((1, LANE), const),
                pl.BlockSpec((LANE, LANE), const), pl.BlockSpec((1, LANE), const),
                pl.BlockSpec((1, LANE), const),    pl.BlockSpec((1, LANE), const),
            ],
            out_specs=pl.BlockSpec((1, groups, LANE), lambda i: (i, 0, 0)),
        ),
        compiler_params=pltpu.CompilerParams(
            dimension_semantics=("parallel",),
            vmem_limit_bytes=32 << 20,
        ),
    )(xp, prepared["w1"], prepared["b1"], prepared["w2"], prepared["b2"],
      prepared["w3"], prepared["b3"], prepared["w4"], prepared["b4"])

    return out.reshape(b_pad, 1)[:b]


def init_params(key, input_dim):
    """Deterministic params; weights stored already-transposed as [Fin, Fout]."""
    ks = jax.random.split(key, 8)

    def lin(kw, fin, fout):
        return jax.random.normal(kw, (fin, fout), jnp.float32) / jnp.sqrt(fin)

    return {
        "w1": lin(ks[0], input_dim, 96), "b1": jax.random.normal(ks[1], (1, 96)) * 0.05,
        "w2": lin(ks[2], 96, 64),        "b2": jax.random.normal(ks[3], (1, 64)) * 0.05,
        "w3": lin(ks[4], 64, 16),        "b3": jax.random.normal(ks[5], (1, 16)) * 0.05,
        "w4": lin(ks[6], 16, 1),         "b4": jax.random.normal(ks[7], (1, 1)) * 0.05,
    }


def _reference(x, params):
    """Pure-JAX f32 reference of EdgeMLP.forward (dropout = identity)."""
    h = jnp.maximum(x @ params["w1"] + params["b1"], 0.0)
    h = jnp.maximum(h @ params["w2"] + params["b2"], 0.0)
    z = h @ params["w3"] + params["b3"]
    return jnp.maximum(z, 0.0) @ params["w4"] + params["b4"]


if __name__ == "__main__":
    key = jax.random.PRNGKey(0)
    k_x, k_p = jax.random.split(key)

    batch = 256
    input_dim = 48

    x = jax.random.normal(k_x, (batch, input_dim), jnp.float32)
    params = init_params(k_p, input_dim)
    prepared = prepare_params(params)          # one-time param prep (hoisted)

    out = edge_mlp_forward(x, prepared)
    out = jax.block_until_ready(out)

    ref = _reference(x, params)
    assert out.shape == (batch, 1)
    # bf16 MXU operands with f32 accumulation -> loosened tolerance vs f32 ref.
    assert jnp.allclose(out, ref, atol=5e-2, rtol=5e-2)

    print("KERNEL_OK")
</pallas_src>

<mosaic_0001>
module attributes {stable_mosaic.version = 11 : i64} {
  func.func @_edge_mlp_kernel(%arg0: i32, %arg1: memref<128x48xf32, #tpu.memory_space<vmem>>, %arg2: memref<48x128xbf16, #tpu.memory_space<vmem>>, %arg3: memref<1x128xf32, #tpu.memory_space<vmem>>, %arg4: memref<128x128xbf16, #tpu.memory_space<vmem>>, %arg5: memref<1x128xf32, #tpu.memory_space<vmem>>, %arg6: memref<128x128xbf16, #tpu.memory_space<vmem>>, %arg7: memref<1x128xf32, #tpu.memory_space<vmem>>, %arg8: memref<1x128xf32, #tpu.memory_space<vmem>>, %arg9: memref<1x128xf32, #tpu.memory_space<vmem>>, %arg10: memref<1x1x128xf32, #tpu.memory_space<vmem>>) attributes {dimension_semantics = [#tpu.dimension_semantics<parallel>], iteration_bounds = array<i64: 2>, scalar_prefetch = 0 : i64, scratch_operands = 0 : i64, tpu.core_type = #tpu.core_type<tc>, window_params = [{transform_indices = @transform_0, window_bounds = array<i64: 128, 48>}, {pipeline_mode = #tpu.pipeline_mode<synchronous>, transform_indices = @transform_1, window_bounds = array<i64: 48, 128>}, {pipeline_mode = #tpu.pipeline_mode<synchronous>, transform_indices = @transform_2, window_bounds = array<i64: 1, 128>}, {pipeline_mode = #tpu.pipeline_mode<synchronous>, transform_indices = @transform_3, window_bounds = array<i64: 128, 128>}, {pipeline_mode = #tpu.pipeline_mode<synchronous>, transform_indices = @transform_4, window_bounds = array<i64: 1, 128>}, {pipeline_mode = #tpu.pipeline_mode<synchronous>, transform_indices = @transform_5, window_bounds = array<i64: 128, 128>}, {pipeline_mode = #tpu.pipeline_mode<synchronous>, transform_indices = @transform_6, window_bounds = array<i64: 1, 128>}, {pipeline_mode = #tpu.pipeline_mode<synchronous>, transform_indices = @transform_7, window_bounds = array<i64: 1, 128>}, {pipeline_mode = #tpu.pipeline_mode<synchronous>, transform_indices = @transform_8, window_bounds = array<i64: 1, 128>}, {transform_indices = @transform_9, window_bounds = array<i64: 1, 1, 128>}]} {
    %c0 = arith.constant 0 : index
    %c0_0 = arith.constant 0 : index
    %0 = vector.load %arg1[%c0, %c0_0] : memref<128x48xf32, #tpu.memory_space<vmem>>, vector<128x48xf32>
    %1 = arith.truncf %0 : vector<128x48xf32> to vector<128x48xbf16>
    %c0_1 = arith.constant 0 : index
    %c0_2 = arith.constant 0 : index
    %2 = vector.load %arg2[%c0_1, %c0_2] : memref<48x128xbf16, #tpu.memory_space<vmem>>, vector<48x128xbf16>
    %cst = arith.constant dense<0.000000e+00> : vector<128x128xf32>
    %3 = tpu.matmul %1, %2, %cst {dimension_numbers = #tpu.dot_dimension_numbers<[1], [0], [0], [1], [0, 0, 1, 1], [], []>} : vector<128x48xbf16>, vector<48x128xbf16>, vector<128x128xf32> -> vector<128x128xf32>
    %c0_3 = arith.constant 0 : index
    %c0_4 = arith.constant 0 : index
    %4 = vector.load %arg3[%c0_3, %c0_4] : memref<1x128xf32, #tpu.memory_space<vmem>>, vector<1x128xf32>
    %5 = vector.broadcast %4 : vector<1x128xf32> to vector<128x128xf32>
    %6 = arith.addf %3, %5 : vector<128x128xf32>
    %cst_5 = arith.constant 0.000000e+00 : f32
    %7 = vector.broadcast %cst_5 : f32 to vector<128x128xf32>
    %8 = arith.maximumf %6, %7 : vector<128x128xf32>
    %9 = arith.truncf %8 : vector<128x128xf32> to vector<128x128xbf16>
    %c0_6 = arith.constant 0 : index
    %c0_7 = arith.constant 0 : index
    %10 = vector.load %arg4[%c0_6, %c0_7] : memref<128x128xbf16, #tpu.memory_space<vmem>>, vector<128x128xbf16>
    %cst_8 = arith.constant dense<0.000000e+00> : vector<128x128xf32>
    %11 = tpu.matmul %9, %10, %cst_8 {dimension_numbers = #tpu.dot_dimension_numbers<[1], [0], [0], [1], [0, 0, 1, 1], [], []>} : vector<128x128xbf16>, vector<128x128xbf16>, vector<128x128xf32> -> vector<128x128xf32>
    %c0_9 = arith.constant 0 : index
    %c0_10 = arith.constant 0 : index
    %12 = vector.load %arg5[%c0_9, %c0_10] : memref<1x128xf32, #tpu.memory_space<vmem>>, vector<1x128xf32>
    %13 = vector.broadcast %12 : vector<1x128xf32> to vector<128x128xf32>
    %14 = arith.addf %11, %13 : vector<128x128xf32>
    %cst_11 = arith.constant 0.000000e+00 : f32
    %15 = vector.broadcast %cst_11 : f32 to vector<128x128xf32>
    %16 = arith.maximumf %14, %15 : vector<128x128xf32>
    %17 = arith.truncf %16 : vector<128x128xf32> to vector<128x128xbf16>
    %c0_12 = arith.constant 0 : index
    %c0_13 = arith.constant 0 : index
    %18 = vector.load %arg6[%c0_12, %c0_13] : memref<128x128xbf16, #tpu.memory_space<vmem>>, vector<128x128xbf16>
    %cst_14 = arith.constant dense<0.000000e+00> : vector<128x128xf32>
    %19 = tpu.matmul %17, %18, %cst_14 {dimension_numbers = #tpu.dot_dimension_numbers<[1], [0], [0], [1], [0, 0, 1, 1], [], []>} : vector<128x128xbf16>, vector<128x128xbf16>, vector<128x128xf32> -> vector<128x128xf32>
    %c0_15 = arith.constant 0 : index
    %c0_16 = arith.constant 0 : index
    %20 = vector.load %arg7[%c0_15, %c0_16] : memref<1x128xf32, #tpu.memory_space<vmem>>, vector<1x128xf32>
    %21 = vector.broadcast %20 : vector<1x128xf32> to vector<128x128xf32>
    %22 = arith.addf %19, %21 : vector<128x128xf32>
    %cst_17 = arith.constant 0.000000e+00 : f32
    %23 = vector.broadcast %cst_17 : f32 to vector<128x128xf32>
    %24 = arith.maximumf %22, %23 : vector<128x128xf32>
    %c0_18 = arith.constant 0 : index
    %c0_19 = arith.constant 0 : index
    %25 = vector.load %arg8[%c0_18, %c0_19] : memref<1x128xf32, #tpu.memory_space<vmem>>, vector<1x128xf32>
    %26 = vector.broadcast %25 : vector<1x128xf32> to vector<128x128xf32>
    %27 = arith.mulf %24, %26 : vector<128x128xf32>
    %28 = vector.shape_cast %27 : vector<128x128xf32> to vector<1x128x128xf32>
    %cst_20 = arith.constant dense<0.000000e+00> : vector<1x128xf32>
    %29 = vector.multi_reduction <add>, %28, %cst_20 [2] : vector<1x128x128xf32> to vector<1x128xf32>
    %c0_21 = arith.constant 0 : index
    %c0_22 = arith.constant 0 : index
    %30 = vector.load %arg9[%c0_21, %c0_22] : memref<1x128xf32, #tpu.memory_space<vmem>>, vector<1x128xf32>
    %31 = arith.addf %29, %30 : vector<1x128xf32>
    %c0_23 = arith.constant 0 : index
    %c0_24 = arith.constant 0 : index
    %c0_25 = arith.constant 0 : index
    %32 = vector.load %arg10[%c0_23, %c0_24, %c0_25] : memref<1x1x128xf32, #tpu.memory_space<vmem>>, vector<1x1x128xf32>
    %33 = vector.shape_cast %32 : vector<1x1x128xf32> to vector<1x128xf32>
    %34 = vector.shape_cast %31 : vector<1x128xf32> to vector<1x1x128xf32>
    tpu.vector_store %arg10[%c0_23, %c0_24, %c0_25], %34 {strides = array<i32>} : memref<1x1x128xf32, #tpu.memory_space<vmem>>, vector<1x1x128xf32>,
    return
  }
  func.func @transform_0(%arg0: i32) -> (i32, i32) {
    %c0_i32 = arith.constant 0 : i32
    %c0_i32_0 = arith.constant 0 : i32
    return %arg0, %c0_i32 : i32, i32
  }
  func.func @transform_1(%arg0: i32) -> (i32, i32) {
    %c0_i32 = arith.constant 0 : i32
    %c0_i32_0 = arith.constant 0 : i32
    %c0_i32_1 = arith.constant 0 : i32
    return %c0_i32, %c0_i32_0 : i32, i32
  }
  func.func @transform_2(%arg0: i32) -> (i32, i32) {
    %c0_i32 = arith.constant 0 : i32
    %c0_i32_0 = arith.constant 0 : i32
    %c0_i32_1 = arith.constant 0 : i32
    return %c0_i32, %c0_i32_0 : i32, i32
  }
  func.func @transform_3(%arg0: i32) -> (i32, i32) {
    %c0_i32 = arith.constant 0 : i32
    %c0_i32_0 = arith.constant 0 : i32
    %c0_i32_1 = arith.constant 0 : i32
    return %c0_i32, %c0_i32_0 : i32, i32
  }
  func.func @transform_4(%arg0: i32) -> (i32, i32) {
    %c0_i32 = arith.constant 0 : i32
    %c0_i32_0 = arith.constant 0 : i32
    %c0_i32_1 = arith.constant 0 : i32
    return %c0_i32, %c0_i32_0 : i32, i32
  }
  func.func @transform_5(%arg0: i32) -> (i32, i32) {
    %c0_i32 = arith.constant 0 : i32
    %c0_i32_0 = arith.constant 0 : i32
    %c0_i32_1 = arith.constant 0 : i32
    return %c0_i32, %c0_i32_0 : i32, i32
  }
  func.func @transform_6(%arg0: i32) -> (i32, i32) {
    %c0_i32 = arith.constant 0 : i32
    %c0_i32_0 = arith.constant 0 : i32
    %c0_i32_1 = arith.constant 0 : i32
    return %c0_i32, %c0_i32_0 : i32, i32
  }
  func.func @transform_7(%arg0: i32) -> (i32, i32) {
    %c0_i32 = arith.constant 0 : i32
    %c0_i32_0 = arith.constant 0 : i32
    %c0_i32_1 = arith.constant 0 : i32
    return %c0_i32, %c0_i32_0 : i32, i32
  }
  func.func @transform_8(%arg0: i32) -> (i32, i32) {
    %c0_i32 = arith.constant 0 : i32
    %c0_i32_0 = arith.constant 0 : i32
    %c0_i32_1 = arith.constant 0 : i32
    return %c0_i32, %c0_i32_0 : i32, i32
  }
  func.func @transform_9(%arg0: i32) -> (i32, i32, i32) {
    %c0_i32 = arith.constant 0 : i32
    %c0_i32_0 = arith.constant 0 : i32
    %c0_i32_1 = arith.constant 0 : i32
    return %arg0, %c0_i32, %c0_i32_0 : i32, i32, i32
  }
}

</mosaic_0001>

<llo_original>
// kernel: tpu_custom_call.1
$region0: #{tpu_custom_call.1}
  #allocation0 [shape = 'u32[]', space=smem, size = 0x4, offset = 0x4, fixed_abs, tag = 'smem constant byte address 0x4 - core index']
  #allocation1 [shape = 'u32[144,128]{1,0:T(1,128)}', space=vmem, size = 0x12000, scoped, tag = 'internal scratch']
  %s0 = inlined_call_operand.vmem [shape: f32[256,48], index: 0, kind: input, shape index: {}]
  %s1 = inlined_call_operand.vmem [shape: bf16[48,128], index: 1, kind: input, shape index: {}]
  %s2 = inlined_call_operand.vmem [shape: f32[1,128], index: 2, kind: input, shape index: {}]
  %s3 = inlined_call_operand.vmem [shape: bf16[128,128], index: 3, kind: input, shape index: {}]
  %s4 = inlined_call_operand.vmem [shape: f32[1,128], index: 4, kind: input, shape index: {}]
  %s5 = inlined_call_operand.vmem [shape: bf16[128,128], index: 5, kind: input, shape index: {}]
  %s6 = inlined_call_operand.vmem [shape: f32[1,128], index: 6, kind: input, shape index: {}]
  %s7 = inlined_call_operand.vmem [shape: f32[1,128], index: 7, kind: input, shape index: {}]
  %s8 = inlined_call_operand.vmem [shape: f32[1,128], index: 8, kind: input, shape index: {}]
  %s9 = inlined_call_operand.hbm [shape: f32[2,1,128], index: 9, kind: output, shape index: {}]
  %s10 = sld [smem:[#allocation0]]
  $region69: #{tpu_custom_call.1} parent=0
    _
  %s12 = ssub.s32 1, %s10
  %s13 = scalar_select 0, %s12, %s10
  $region1: #{tpu_custom_call.1} parent=0
    #allocation2 [shape = 'u8[1024]{0}', space=vmem, size = 0x400, scoped, tag = 'output window, operand 0']
    #allocation3 [shape = 's32[2]{0}', space=sflag, size = 0x8, scoped, tag = 'scoped memory for tpu_custom_call.1']
    %14 = vsyncpa [#allocation3], 0
    %s15 = scalar_lea.sflag [#allocation3], 1
    %16 = vsyncpa %s15, 0
    loop: start=0, step=1, limit=4
    $region2: #{tpu_custom_call.1} parent=1 // loop_pre_header
      _
    $region3: #{tpu_custom_call.1} parent=1 // loop_header
      %s18 = sphi 0, %s22
      %p19 = scmp.ge.s32.totalorder %s18, 4
      %s28 = sphi 0, %s30
      %s31 = sphi 0, %s28
      %s32 = sphi 0, %s31
      %s48 = sphi 0, %s32
      %s52 = sphi 0, %s52
      %s54 = sphi 0, %s52
      %s55 = sphi 0, %s54
      %s69 = sphi 0, %s55
      %s73 = sphi 0, %s73
      %s75 = sphi 0, %s73
      %s76 = sphi 0, %s75
      %s90 = sphi 0, %s76
      %s94 = sphi 0, %s94
      %s96 = sphi 0, %s94
      %s97 = sphi 0, %s96
      %s111 = sphi 0, %s97
      %s115 = sphi 0, %s115
      %s117 = sphi 0, %s115
      %s118 = sphi 0, %s117
      %s132 = sphi 0, %s118
      %s136 = sphi 0, %s136
      %s138 = sphi 0, %s136
      %s139 = sphi 0, %s138
      %s153 = sphi 0, %s139
      %s157 = sphi 0, %s157
      %s159 = sphi 0, %s157
      %s160 = sphi 0, %s159
      %s174 = sphi 0, %s160
      %s178 = sphi 0, %s178
      %s180 = sphi 0, %s178
      %s181 = sphi 0, %s180
      %s195 = sphi 0, %s181
      %s199 = sphi 0, %s199
      %s201 = sphi 0, %s199
      %s202 = sphi 0, %s201
      %s216 = sphi 0, %s202
      %s222 = sphi 0, %s224
      %s225 = sphi 0, %s222
      %s226 = sphi 0, %s225
      %s242 = sphi 0, %s226
    $region4: #{tpu_custom_call.1} parent=1 // loop_header_branch
      %21 = sbr.rel (%p19) target = $region8
    $region5: #{tpu_custom_call.1} parent=1 // loop_body
      %s23 = ssub.s32 %s18, 1
      %s24 = ssub.s32 %s18, 2
      %s25 = sadd.s32 %s18, 1
      %s26 = ssub.s32 %s18, %s25
      %p27 = scmp.eq.s32.totalorder %s26, 0
      %s29 = sadd.s32 %s28, 1
      %s30 = scalar_select %p27, %s28, %s29
      %p33 = pneg %p27
      %p34 = scmp.eq.s32.totalorder %s18, 1
      %p35 = por %p33, %p34
      %p36 = scmp.ne.s32.totalorder %s28, %s31
      %p37 = scmp.eq.s32.totalorder %s18, 0
      %p38 = por %p36, %p37
      %p39 = scmp.ne.s32.totalorder %s28, %s31
      %p40 = scmp.eq.s32.totalorder %s23, 1
      %p41 = por %p39, %p40
      %p42 = scmp.ne.s32.totalorder %s31, %s32
      %p43 = scmp.eq.s32.totalorder %s23, 0
      %p44 = por %p42, %p43
      %p45 = scmp.ne.s32.totalorder %s31, %s32
      %p46 = scmp.eq.s32.totalorder %s24, 1
      %p47 = por %p45, %p46
      %p49 = scmp.ne.s32.totalorder %s32, %s48
      %p50 = scmp.eq.s32.totalorder %s24, 0
      %p51 = por %p49, %p50
      %s53 = sadd.s32 %s52, 1
      %p56 = scmp.eq.s32.totalorder %s18, 1
      %p57 = scmp.ne.s32.totalorder %s52, %s54
      %p58 = scmp.eq.s32.totalorder %s18, 0
      %p59 = por %p57, %p58
      %p60 = scmp.ne.s32.totalorder %s52, %s54
      %p61 = scmp.eq.s32.totalorder %s23, 1
      %p62 = por %p60, %p61
      %p63 = scmp.ne.s32.totalorder %s54, %s55
      %p64 = scmp.eq.s32.totalorder %s23, 0
      %p65 = por %p63, %p64
      %p66 = scmp.ne.s32.totalorder %s54, %s55
      %p67 = scmp.eq.s32.totalorder %s24, 1
      %p68 = por %p66, %p67
      %p70 = scmp.ne.s32.totalorder %s55, %s69
      %p71 = scmp.eq.s32.totalorder %s24, 0
      %p72 = por %p70, %p71
      %s74 = sadd.s32 %s73, 1
      %p77 = scmp.eq.s32.totalorder %s18, 1
      %p78 = scmp.ne.s32.totalorder %s73, %s75
      %p79 = scmp.eq.s32.totalorder %s18, 0
      %p80 = por %p78, %p79
      %p81 = scmp.ne.s32.totalorder %s73, %s75
      %p82 = scmp.eq.s32.totalorder %s23, 1
      %p83 = por %p81, %p82
      %p84 = scmp.ne.s32.totalorder %s75, %s76
      %p85 = scmp.eq.s32.totalorder %s23, 0
      %p86 = por %p84, %p85
      %p87 = scmp.ne.s32.totalorder %s75, %s76
      %p88 = scmp.eq.s32.totalorder %s24, 1
      %p89 = por %p87, %p88
      %p91 = scmp.ne.s32.totalorder %s76, %s90
      %p92 = scmp.eq.s32.totalorder %s24, 0
      %p93 = por %p91, %p92
      %s95 = sadd.s32 %s94, 1
      %p98 = scmp.eq.s32.totalorder %s18, 1
      %p99 = scmp.ne.s32.totalorder %s94, %s96
      %p100 = scmp.eq.s32.totalorder %s18, 0
      %p101 = por %p99, %p100
      %p102 = scmp.ne.s32.totalorder %s94, %s96
      %p103 = scmp.eq.s32.totalorder %s23, 1
      %p104 = por %p102, %p103
      %p105 = scmp.ne.s32.totalorder %s96, %s97
      %p106 = scmp.eq.s32.totalorder %s23, 0
      %p107 = por %p105, %p106
      %p108 = scmp.ne.s32.totalorder %s96, %s97
      %p109 = scmp.eq.s32.totalorder %s24, 1
      %p110 = por %p108, %p109
      %p112 = scmp.ne.s32.totalorder %s97, %s111
      %p113 = scmp.eq.s32.totalorder %s24, 0
      %p114 = por %p112, %p113
      %s116 = sadd.s32 %s115, 1
      %p119 = scmp.eq.s32.totalorder %s18, 1
      %p120 = scmp.ne.s32.totalorder %s115, %s117
      %p121 = scmp.eq.s32.totalorder %s18, 0
      %p122 = por %p120, %p121
      %p123 = scmp.ne.s32.totalorder %s115, %s117
      %p124 = scmp.eq.s32.totalorder %s23, 1
      %p125 = por %p123, %p124
      %p126 = scmp.ne.s32.totalorder %s117, %s118
      %p127 = scmp.eq.s32.totalorder %s23, 0
      %p128 = por %p126, %p127
      %p129 = scmp.ne.s32.totalorder %s117, %s118
      %p130 = scmp.eq.s32.totalorder %s24, 1
      %p131 = por %p129, %p130
      %p133 = scmp.ne.s32.totalorder %s118, %s132
      %p134 = scmp.eq.s32.totalorder %s24, 0
      %p135 = por %p133, %p134
      %s137 = sadd.s32 %s136, 1
      %p140 = scmp.eq.s32.totalorder %s18, 1
      %p141 = scmp.ne.s32.totalorder %s136, %s138
      %p142 = scmp.eq.s32.totalorder %s18, 0
      %p143 = por %p141, %p142
      %p144 = scmp.ne.s32.totalorder %s136, %s138
      %p145 = scmp.eq.s32.totalorder %s23, 1
      %p146 = por %p144, %p145
      %p147 = scmp.ne.s32.totalorder %s138, %s139
      %p148 = scmp.eq.s32.totalorder %s23, 0
      %p149 = por %p147, %p148
      %p150 = scmp.ne.s32.totalorder %s138, %s139
      %p151 = scmp.eq.s32.totalorder %s24, 1
      %p152 = por %p150, %p151
      %p154 = scmp.ne.s32.totalorder %s139, %s153
      %p155 = scmp.eq.s32.totalorder %s24, 0
      %p156 = por %p154, %p155
      %s158 = sadd.s32 %s157, 1
      %p161 = scmp.eq.s32.totalorder %s18, 1
      %p162 = scmp.ne.s32.totalorder %s157, %s159
      %p163 = scmp.eq.s32.totalorder %s18, 0
      %p164 = por %p162, %p163
      %p165 = scmp.ne.s32.totalorder %s157, %s159
      %p166 = scmp.eq.s32.totalorder %s23, 1
      %p167 = por %p165, %p166
      %p168 = scmp.ne.s32.totalorder %s159, %s160
      %p169 = scmp.eq.s32.totalorder %s23, 0
      %p170 = por %p168, %p169
      %p171 = scmp.ne.s32.totalorder %s159, %s160
      %p172 = scmp.eq.s32.totalorder %s24, 1
      %p173 = por %p171, %p172
      %p175 = scmp.ne.s32.totalorder %s160, %s174
      %p176 = scmp.eq.s32.totalorder %s24, 0
      %p177 = por %p175, %p176
      %s179 = sadd.s32 %s178, 1
      %p182 = scmp.eq.s32.totalorder %s18, 1
      %p183 = scmp.ne.s32.totalorder %s178, %s180
      %p184 = scmp.eq.s32.totalorder %s18, 0
      %p185 = por %p183, %p184
      %p186 = scmp.ne.s32.totalorder %s178, %s180
      %p187 = scmp.eq.s32.totalorder %s23, 1
      %p188 = por %p186, %p187
      %p189 = scmp.ne.s32.totalorder %s180, %s181
      %p190 = scmp.eq.s32.totalorder %s23, 0
      %p191 = por %p189, %p190
      %p192 = scmp.ne.s32.totalorder %s180, %s181
      %p193 = scmp.eq.s32.totalorder %s24, 1
      %p194 = por %p192, %p193
      %p196 = scmp.ne.s32.totalorder %s181, %s195
      %p197 = scmp.eq.s32.totalorder %s24, 0
      %p198 = por %p196, %p197
      %s200 = sadd.s32 %s199, 1
      %p203 = scmp.eq.s32.totalorder %s18, 1
      %p204 = scmp.ne.s32.totalorder %s199, %s201
      %p205 = scmp.eq.s32.totalorder %s18, 0
      %p206 = por %p204, %p205
      %p207 = scmp.ne.s32.totalorder %s199, %s201
      %p208 = scmp.eq.s32.totalorder %s23, 1
      %p209 = por %p207, %p208
      %p210 = scmp.ne.s32.totalorder %s201, %s202
      %p211 = scmp.eq.s32.totalorder %s23, 0
      %p212 = por %p210, %p211
      %p213 = scmp.ne.s32.totalorder %s201, %s202
      %p214 = scmp.eq.s32.totalorder %s24, 1
      %p215 = por %p213, %p214
      %p217 = scmp.ne.s32.totalorder %s202, %s216
      %p218 = scmp.eq.s32.totalorder %s24, 0
      %p219 = por %p217, %p218
      %s220 = ssub.s32 %s18, %s25
      %p221 = scmp.eq.s32.totalorder %s220, 0
      %s223 = sadd.s32 %s222, 1
      %s224 = scalar_select %p221, %s222, %s223
      %p227 = pneg %p221
      %p228 = scmp.eq.s32.totalorder %s18, 1
      %p229 = por %p227, %p228
      %p230 = scmp.ne.s32.totalorder %s222, %s225
      %p231 = scmp.eq.s32.totalorder %s18, 0
      %p232 = por %p230, %p231
      %p233 = scmp.ne.s32.totalorder %s222, %s225
      %p234 = scmp.eq.s32.totalorder %s23, 1
      %p235 = por %p233, %p234
      %p236 = scmp.ne.s32.totalorder %s225, %s226
      %p237 = scmp.eq.s32.totalorder %s23, 0
      %p238 = por %p236, %p237
      %p239 = scmp.ne.s32.totalorder %s225, %s226
      %p240 = scmp.eq.s32.totalorder %s24, 1
      %p241 = por %p239, %p240
      %p243 = scmp.ne.s32.totalorder %s226, %s242
      %p244 = scmp.eq.s32.totalorder %s24, 0
      %p245 = por %p243, %p244
      %p246 = scmp.le.s32.totalorder 1, %s18
      %p247 = scmp.lt.s32.totalorder %s18, 3
      %p248 = pnand %p246, %p247
      %p249 = pneg %p248
      // Predicated region
      $region9: #{tpu_custom_call.1} parent=5 // pred_check
        _
      $region10: #{tpu_custom_call.1} parent=5 // pred_check_branch
        %251 = sbr.rel (%p248) target = $region12
      $region11: #{tpu_custom_call.1} parent=5 // pred_region
        %s252 = ssub.s32 %s18, 1
        // Predicated region
        $region13: #{tpu_custom_call.1} parent=11 // pred_check
          %p253 = pneg %p65
        $region14: #{tpu_custom_call.1} parent=11 // pred_check_branch
          %255 = sbr.rel (%p253) target = $region16
        $region15: #{tpu_custom_call.1} parent=11 // pred_region
          _
        $region16: #{tpu_custom_call.1} parent=11 // pred_fallthru
          _
        // Predicated region
        $region17: #{tpu_custom_call.1} parent=11 // pred_check
          %p256 = pneg %p86
        $region18: #{tpu_custom_call.1} parent=11 // pred_check_branch
          %258 = sbr.rel (%p256) target = $region20
        $region19: #{tpu_custom_call.1} parent=11 // pred_region
          _
        $region20: #{tpu_custom_call.1} parent=11 // pred_fallthru
          _
        // Predicated region
        $region21: #{tpu_custom_call.1} parent=11 // pred_check
          %p259 = pneg %p107
        $region22: #{tpu_custom_call.1} parent=11 // pred_check_branch
          %261 = sbr.rel (%p259) target = $region24
        $region23: #{tpu_custom_call.1} parent=11 // pred_region
          _
        $region24: #{tpu_custom_call.1} parent=11 // pred_fallthru
          _
        // Predicated region
        $region25: #{tpu_custom_call.1} parent=11 // pred_check
          %p262 = pneg %p128
        $region26: #{tpu_custom_call.1} parent=11 // pred_check_branch
          %264 = sbr.rel (%p262) target = $region28
        $region27: #{tpu_custom_call.1} parent=11 // pred_region
          _
        $region28: #{tpu_custom_call.1} parent=11 // pred_fallthru
          _
        // Predicated region
        $region29: #{tpu_custom_call.1} parent=11 // pred_check
          %p265 = pneg %p149
        $region30: #{tpu_custom_call.1} parent=11 // pred_check_branch
          %267 = sbr.rel (%p265) target = $region32
        $region31: #{tpu_custom_call.1} parent=11 // pred_region
          _
        $region32: #{tpu_custom_call.1} parent=11 // pred_fallthru
          _
        // Predicated region
        $region33: #{tpu_custom_call.1} parent=11 // pred_check
          %p268 = pneg %p170
        $region34: #{tpu_custom_call.1} parent=11 // pred_check_branch
          %270 = sbr.rel (%p268) target = $region36
        $region35: #{tpu_custom_call.1} parent=11 // pred_region
          _
        $region36: #{tpu_custom_call.1} parent=11 // pred_fallthru
          _
        // Predicated region
        $region37: #{tpu_custom_call.1} parent=11 // pred_check
          %p271 = pneg %p191
        $region38: #{tpu_custom_call.1} parent=11 // pred_check_branch
          %273 = sbr.rel (%p271) target = $region40
        $region39: #{tpu_custom_call.1} parent=11 // pred_region
          _
        $region40: #{tpu_custom_call.1} parent=11 // pred_fallthru
          _
        // Predicated region
        $region41: #{tpu_custom_call.1} parent=11 // pred_check
          %p274 = pneg %p212
        $region42: #{tpu_custom_call.1} parent=11 // pred_check_branch
          %276 = sbr.rel (%p274) target = $region44
        $region43: #{tpu_custom_call.1} parent=11 // pred_region
          _
        $region44: #{tpu_custom_call.1} parent=11 // pred_fallthru
          _
      $region12: #{tpu_custom_call.1} parent=5 // pred_fallthru
        _
      %p277 = scmp.lt.s32.totalorder %s18, 2
      // Predicated region
      $region45: #{tpu_custom_call.1} parent=5 // pred_check
        %p278 = pneg %p277
      $region46: #{tpu_custom_call.1} parent=5 // pred_check_branch
        %280 = sbr.rel (%p278) target = $region48
      $region47: #{tpu_custom_call.1} parent=5 // pred_region
        // Predicated region
        $region49: #{tpu_custom_call.1} parent=47 // pred_check
          %p281 = pneg %p38
        $region50: #{tpu_custom_call.1} parent=47 // pred_check_branch
          %283 = sbr.rel (%p281) target = $region52
        $region51: #{tpu_custom_call.1} parent=47 // pred_region
          %s284 = smul.u32 16, %s18
          %p285 = scmp.lt.s32.totalorder %s284, 31
          %s286 = scalar_select %p285, %s284, 31
          %s287 = smul.addr %s286, 8
          %s288 = scalar_lea.vmem %s0, %s287
          %s289 = smul.u32 16, %s18
        $region52: #{tpu_custom_call.1} parent=47 // pred_fallthru
          _
      $region48: #{tpu_custom_call.1} parent=5 // pred_fallthru
        _
      %p290 = scmp.le.s32.totalorder 1, %s18
      %p291 = scmp.lt.s32.totalorder %s18, 3
      %p292 = pnand %p290, %p291
      %p293 = pneg %p292
      // Predicated region
      $region53: #{tpu_custom_call.1} parent=5 // pred_check
        _
      $region54: #{tpu_custom_call.1} parent=5 // pred_check_branch
        %295 = sbr.rel (%p292) target = $region56
      $region55: #{tpu_custom_call.1} parent=5 // pred_region
        %s296 = ssub.s32 %s18, 1
        %s297 = smul.u32 16, %s23
        %p298 = scmp.lt.s32.totalorder %s297, 31
        %s299 = scalar_select %p298, %s297, 31
        %s300 = smul.addr %s299, 8
        %s301 = scalar_lea.vmem %s0, %s300
        %p302 = pneg %p44
        %p303 = pneg %p41
        %p304 = pneg %p65
        %p305 = pneg %p62
        %p306 = pneg %p86
        %p307 = pneg %p83
        %p308 = pneg %p107
        %p309 = pneg %p104
        %p310 = pneg %p128
        %p311 = pneg %p125
        %p312 = pneg %p149
        %p313 = pneg %p146
        %p314 = pneg %p170
        %p315 = pneg %p167
        %p316 = pneg %p191
        %p317 = pneg %p188
        %p318 = pneg %p212
        %p319 = pneg %p209
        %p320 = pneg %p238
        %p321 = pneg %p235
        %s322 = sand.u32 %s225, 1
        %s323 = scalar_lea.sflag [#allocation3], %s322
        %s324 = sand.u32 %s225, 1
        %s325 = scalar_lea.vmem [#allocation2], %s324
        %s326 = smul.u32 16, %s23
        %p327 = scmp.lt.s32.totalorder %s326, 31
        %s328 = scalar_select %p327, %s326, 31
        %s329 = smul.addr %s328, 8
        %s330 = scalar_lea.vmem %s0, %s329
        %s331 = smul.u32 16, %s23
        %v333 = vld [vmem:[%s330] sm:$0xff]
        %v334 = vld [vmem:[%s330 + $0x8] sm:$0xff]
        %v335 = vld [vmem:[%s330 + $0x10] sm:$0xff]
        %v336 = vld [vmem:[%s330 + $0x18] sm:$0xff]
        %v337 = vld [vmem:[%s330 + $0x20] sm:$0xff]
        %v338 = vld [vmem:[%s330 + $0x28] sm:$0xff]
        %v339 = vld [vmem:[%s330 + $0x30] sm:$0xff]
        %v340 = vld [vmem:[%s330 + $0x38] sm:$0xff]
        %v341 = vld [vmem:[%s330 + $0x40] sm:$0xff]
        %v342 = vld [vmem:[%s330 + $0x48] sm:$0xff]
        %v343 = vld [vmem:[%s330 + $0x50] sm:$0xff]
        %v344 = vld [vmem:[%s330 + $0x58] sm:$0xff]
        %v345 = vld [vmem:[%s330 + $0x60] sm:$0xff]
        %v346 = vld [vmem:[%s330 + $0x68] sm:$0xff]
        %v347 = vld [vmem:[%s330 + $0x70] sm:$0xff]
        %v348 = vld [vmem:[%s330 + $0x78] sm:$0xff]
        %v349 = vpack.c.bf16 %v334, %v333
        %v350 = vpack.c.bf16 %v336, %v335
        %v351 = vpack.c.bf16 %v338, %v337
        %v352 = vpack.c.bf16 %v340, %v339
        %v353 = vpack.c.bf16 %v342, %v341
        %v354 = vpack.c.bf16 %v344, %v343
        %v355 = vpack.c.bf16 %v346, %v345
        %v356 = vpack.c.bf16 %v348, %v347
        %v357 = vld [vmem:[%s1] sm:$0xf]
        %v358 = vld [vmem:[%s1 + $0x4] sm:$0xf]
        %v359 = vld [vmem:[%s1 + $0x8] sm:$0xf]
        %v360 = vld [vmem:[%s1 + $0xc] sm:$0xf]
        %v361 = vld [vmem:[%s1 + $0x10] sm:$0xf]
        %v362 = vld [vmem:[%s1 + $0x14] sm:$0xf]
        %v363 = vld [vmem:[%s2] sm:$0x1]
        %v365 = vlaneseq
        %v366 = vshrl.u32 %v365, 7
        %v367 = vsub.s32 0, %v366
        %v368 = vrot.slane %v363, %v367
        %v376 = vunpack.c.l.b16 %v357
        %v377 = vunpack.c.l.b16 %v358
        %v378 = vunpack.c.l.b16 %v359
        %v379 = vunpack.c.l.b16 %v360
        %v380 = vunpack.c.l.b16 %v361
        %v381 = vunpack.c.l.b16 %v362
        %v382 = vpack.c.b16 %v377, %v376
        %v383 = vpack.c.b16 %v379, %v378
        %v384 = vpack.c.b16 %v381, %v380
        %vm388 = vcmask 392192
        %v390 = vsel %vm388, %v349, 0
        %v393 = vsel %vm388, %v350, 0
        %v396 = vsel %vm388, %v351, 0
        %v399 = vsel %vm388, %v352, 0
        %v402 = vsel %vm388, %v353, 0
        %v405 = vsel %vm388, %v354, 0
        %v408 = vsel %vm388, %v355, 0
        %v411 = vsel %vm388, %v356, 0
        %413 = vmatprep.subr.bf16.mxu0 0
        %414 = vmatpush1.bf16.msra.mxu0 %v382
        %415 = vmatprep.subr.bf16.mxu0 0
        %416 = vmatpush1.bf16.msra.mxu0 %v383
        %417 = vmatprep.subr.bf16.mxu0 0
        %418 = vmatpush1.bf16.msra.mxu0 %v384
        %419 = vmatprep.subr.bf16.mxu0 0
        %420 = vmatpush1.bf16.msra.mxu0 0
        %421 = vmatprep.subr.bf16.mxu0 0
        %422 = vmatpush1.bf16.msra.mxu0 0
        %423 = vmatprep.subr.bf16.mxu0 0
        %424 = vmatpush1.bf16.msra.mxu0 0
        %425 = vmatprep.subr.bf16.mxu0 0
        %426 = vmatpush1.bf16.msra.mxu0 0
        %427 = vmatprep.subr.bf16.mxu0 0
        %428 = vmatpush1.bf16.msra.mxu0 0
        %429 = vmatprep.subr.bf16.mxu0 0
        %430 = vmatpush1.bf16.msra.mxu0 0
        %431 = vmatprep.subr.bf16.mxu0 0
        %432 = vmatpush1.bf16.msra.mxu0 0
        %433 = vmatprep.subr.bf16.mxu0 0
        %434 = vmatpush1.bf16.msra.mxu0 0
        %435 = vmatprep.subr.bf16.mxu0 0
        %436 = vmatpush1.bf16.msra.mxu0 0
        %437 = vmatprep.subr.bf16.mxu0 0
        %438 = vmatpush1.bf16.msra.mxu0 0
        %439 = vmatprep.subr.bf16.mxu0 0
        %440 = vmatpush1.bf16.msra.mxu0 0
        %441 = vmatprep.subr.bf16.mxu0 0
        %442 = vmatpush1.bf16.msra.mxu0 0
        %443 = vmatprep.subr.bf16.mxu0 0
        %444 = vmatpush1.bf16.msra.mxu0 0
        %445 = vmatprep.mubr.bf16.mxu0 0
        %446 = vmatmul.mubr.bf16.gmra.mrb[0].mxu0 %v390
        %v447 = vpop.f32.mrb[0].mxu0
        %v448 = vadd.f32 %v368, %v447
        %v449 = vpop.f32.mrb[0].mxu0
        %v450 = vpop.f32.mrb[0].mxu0
        %v451 = vadd.f32 %v368, %v450
        %v452 = vpop.f32.mrb[0].mxu0
        %453 = vmatprep.mubr.bf16.mxu0 0
        %454 = vmatmul.mubr.bf16.gmra.mrb[0].mxu0 %v393
        %v455 = vpop.f32.mrb[0].mxu0
        %v456 = vadd.f32 %v368, %v455
        %v457 = vpop.f32.mrb[0].mxu0
        %v458 = vpop.f32.mrb[0].mxu0
        %v459 = vadd.f32 %v368, %v458
        %v460 = vpop.f32.mrb[0].mxu0
        %461 = vmatprep.mubr.bf16.mxu0 0
        %462 = vmatmul.mubr.bf16.gmra.mrb[0].mxu0 %v396
        %v463 = vpop.f32.mrb[0].mxu0
        %v464 = vadd.f32 %v368, %v463
        %v465 = vpop.f32.mrb[0].mxu0
        %v466 = vpop.f32.mrb[0].mxu0
        %v467 = vadd.f32 %v368, %v466
        %v468 = vpop.f32.mrb[0].mxu0
        %469 = vmatprep.mubr.bf16.mxu0 0
        %470 = vmatmul.mubr.bf16.gmra.mrb[0].mxu0 %v399
        %v471 = vpop.f32.mrb[0].mxu0
        %v472 = vadd.f32 %v368, %v471
        %v473 = vpop.f32.mrb[0].mxu0
        %v474 = vpop.f32.mrb[0].mxu0
        %v475 = vadd.f32 %v368, %v474
        %v476 = vpop.f32.mrb[0].mxu0
        %477 = vmatprep.mubr.bf16.mxu0 0
        %478 = vmatmul.mubr.bf16.gmra.mrb[0].mxu0 %v402
        %v479 = vpop.f32.mrb[0].mxu0
        %v480 = vadd.f32 %v368, %v479
        %v481 = vpop.f32.mrb[0].mxu0
        %v482 = vpop.f32.mrb[0].mxu0
        %v483 = vadd.f32 %v368, %v482
        %v484 = vpop.f32.mrb[0].mxu0
        %485 = vmatprep.mubr.bf16.mxu0 0
        %486 = vmatmul.mubr.bf16.gmra.mrb[0].mxu0 %v405
        %v487 = vpop.f32.mrb[0].mxu0
        %v488 = vadd.f32 %v368, %v487
        %v489 = vpop.f32.mrb[0].mxu0
        %v490 = vpop.f32.mrb[0].mxu0
        %v491 = vadd.f32 %v368, %v490
        %v492 = vpop.f32.mrb[0].mxu0
        %493 = vmatprep.mubr.bf16.mxu0 0
        %494 = vmatmul.mubr.bf16.gmra.mrb[0].mxu0 %v408
        %v495 = vpop.f32.mrb[0].mxu0
        %v496 = vadd.f32 %v368, %v495
        %v497 = vpop.f32.mrb[0].mxu0
        %v498 = vpop.f32.mrb[0].mxu0
        %v499 = vadd.f32 %v368, %v498
        %v500 = vpop.f32.mrb[0].mxu0
        %501 = vmatprep.mubr.bf16.mxu0 0
        %502 = vmatmul.mubr.bf16.gmra.mrb[0].mxu0 %v411
        %v503 = vpop.f32.mrb[0].mxu0
        %v504 = vadd.f32 %v368, %v503
        %v505 = vpop.f32.mrb[0].mxu0
        %v506 = vpop.f32.mrb[0].mxu0
        %v507 = vadd.f32 %v368, %v506
        %v508 = vpop.f32.mrb[0].mxu0
        %509 = vdwg.mxu0
        %v510 = vmax.f32 %v448, 0.0
        %v511 = vmax.f32 %v451, 0.0
        %v512 = vmax.f32 %v456, 0.0
        %v513 = vmax.f32 %v459, 0.0
        %v514 = vmax.f32 %v464, 0.0
        %v515 = vmax.f32 %v467, 0.0
        %v516 = vmax.f32 %v472, 0.0
        %v517 = vmax.f32 %v475, 0.0
        %v518 = vmax.f32 %v480, 0.0
        %v519 = vmax.f32 %v483, 0.0
        %v520 = vmax.f32 %v488, 0.0
        %v521 = vmax.f32 %v491, 0.0
        %v522 = vmax.f32 %v496, 0.0
        %v523 = vmax.f32 %v499, 0.0
        %v524 = vmax.f32 %v504, 0.0
        %v525 = vmax.f32 %v507, 0.0
        %v526 = vpack.c.bf16 %v511, %v510
        %v527 = vpack.c.bf16 %v513, %v512
        %v528 = vpack.c.bf16 %v515, %v514
        %v529 = vpack.c.bf16 %v517, %v516
        %v530 = vpack.c.bf16 %v519, %v518
        %v531 = vpack.c.bf16 %v521, %v520
        %v532 = vpack.c.bf16 %v523, %v522
        %v533 = vpack.c.bf16 %v525, %v524
        %v534 = vld [vmem:[%s3] sm:$0xf]
        %v535 = vld [vmem:[%s3 + $0x4] sm:$0xf]
        %v536 = vld [vmem:[%s3 + $0x8] sm:$0xf]
        %v537 = vld [vmem:[%s3 + $0xc] sm:$0xf]
        %v538 = vld [vmem:[%s3 + $0x10] sm:$0xf]
        %v539 = vld [vmem:[%s3 + $0x14] sm:$0xf]
        %v540 = vld [vmem:[%s3 + $0x18] sm:$0xf]
        %v541 = vld [vmem:[%s3 + $0x1c] sm:$0xf]
        %v542 = vld [vmem:[%s3 + $0x20] sm:$0xf]
        %v543 = vld [vmem:[%s3 + $0x24] sm:$0xf]
        %v544 = vld [vmem:[%s3 + $0x28] sm:$0xf]
        %v545 = vld [vmem:[%s3 + $0x2c] sm:$0xf]
        %v546 = vld [vmem:[%s3 + $0x30] sm:$0xf]
        %v547 = vld [vmem:[%s3 + $0x34] sm:$0xf]
        %v548 = vld [vmem:[%s3 + $0x38] sm:$0xf]
        %v549 = vld [vmem:[%s3 + $0x3c] sm:$0xf]
        %v550 = vld [vmem:[%s4] sm:$0x1]
        %v552 = vlaneseq
        %v553 = vshrl.u32 %v552, 7
        %v554 = vsub.s32 0, %v553
        %v555 = vrot.slane %v550, %v554
        %v573 = vunpack.c.l.b16 %v534
        %v574 = vunpack.c.l.b16 %v535
        %v575 = vunpack.c.l.b16 %v536
        %v576 = vunpack.c.l.b16 %v537
        %v577 = vunpack.c.l.b16 %v538
        %v578 = vunpack.c.l.b16 %v539
        %v579 = vunpack.c.l.b16 %v540
        %v580 = vunpack.c.l.b16 %v541
        %v581 = vunpack.c.l.b16 %v542
        %v582 = vunpack.c.l.b16 %v543
        %v583 = vunpack.c.l.b16 %v544
        %v584 = vunpack.c.l.b16 %v545
        %v585 = vunpack.c.l.b16 %v546
        %v586 = vunpack.c.l.b16 %v547
        %v587 = vunpack.c.l.b16 %v548
        %v588 = vunpack.c.l.b16 %v549
        %v589 = vpack.c.b16 %v574, %v573
        %v590 = vpack.c.b16 %v576, %v575
        %v591 = vpack.c.b16 %v578, %v577
        %v592 = vpack.c.b16 %v580, %v579
        %v593 = vpack.c.b16 %v582, %v581
        %v594 = vpack.c.b16 %v584, %v583
        %v595 = vpack.c.b16 %v586, %v585
        %v596 = vpack.c.b16 %v588, %v587
        %605 = vmatprep.subr.bf16.mxu0 0
        %606 = vmatpush1.bf16.msra.mxu0 %v589
        %607 = vmatprep.subr.bf16.mxu0 0
        %608 = vmatpush1.bf16.msra.mxu0 %v590
        %609 = vmatprep.subr.bf16.mxu0 0
        %610 = vmatpush1.bf16.msra.mxu0 %v591
        %611 = vmatprep.subr.bf16.mxu0 0
        %612 = vmatpush1.bf16.msra.mxu0 %v592
        %613 = vmatprep.subr.bf16.mxu0 0
        %614 = vmatpush1.bf16.msra.mxu0 %v593
        %615 = vmatprep.subr.bf16.mxu0 0
        %616 = vmatpush1.bf16.msra.mxu0 %v594
        %617 = vmatprep.subr.bf16.mxu0 0
        %618 = vmatpush1.bf16.msra.mxu0 %v595
        %619 = vmatprep.subr.bf16.mxu0 0
        %620 = vmatpush1.bf16.msra.mxu0 %v596
        %621 = vmatprep.subr.bf16.mxu0 0
        %622 = vmatpush1.bf16.msra.mxu0 0
        %623 = vmatprep.subr.bf16.mxu0 0
        %624 = vmatpush1.bf16.msra.mxu0 0
        %625 = vmatprep.subr.bf16.mxu0 0
        %626 = vmatpush1.bf16.msra.mxu0 0
        %627 = vmatprep.subr.bf16.mxu0 0
        %628 = vmatpush1.bf16.msra.mxu0 0
        %629 = vmatprep.subr.bf16.mxu0 0
        %630 = vmatpush1.bf16.msra.mxu0 0
        %631 = vmatprep.subr.bf16.mxu0 0
        %632 = vmatpush1.bf16.msra.mxu0 0
        %633 = vmatprep.subr.bf16.mxu0 0
        %634 = vmatpush1.bf16.msra.mxu0 0
        %635 = vmatprep.subr.bf16.mxu0 0
        %636 = vmatpush1.bf16.msra.mxu0 0
        %637 = vmatprep.mubr.bf16.mxu0 0
        %638 = vmatmul.mubr.bf16.gmra.mrb[0].mxu0 %v526
        %v639 = vpop.f32.mrb[0].mxu0
        %v640 = vadd.f32 %v555, %v639
        %v641 = vpop.f32.mrb[0].mxu0
        %v642 = vpop.f32.mrb[0].mxu0
        %v643 = vadd.f32 %v555, %v642
        %v644 = vpop.f32.mrb[0].mxu0
        %645 = vmatprep.mubr.bf16.mxu0 0
        %646 = vmatmul.mubr.bf16.gmra.mrb[0].mxu0 %v527
        %v647 = vpop.f32.mrb[0].mxu0
        %v648 = vadd.f32 %v555, %v647
        %v649 = vpop.f32.mrb[0].mxu0
        %v650 = vpop.f32.mrb[0].mxu0
        %v651 = vadd.f32 %v555, %v650
        %v652 = vpop.f32.mrb[0].mxu0
        %653 = vmatprep.mubr.bf16.mxu0 0
        %654 = vmatmul.mubr.bf16.gmra.mrb[0].mxu0 %v528
        %v655 = vpop.f32.mrb[0].mxu0
        %v656 = vadd.f32 %v555, %v655
        %v657 = vpop.f32.mrb[0].mxu0
        %v658 = vpop.f32.mrb[0].mxu0
        %v659 = vadd.f32 %v555, %v658
        %v660 = vpop.f32.mrb[0].mxu0
        %661 = vmatprep.mubr.bf16.mxu0 0
        %662 = vmatmul.mubr.bf16.gmra.mrb[0].mxu0 %v529
        %v663 = vpop.f32.mrb[0].mxu0
        %v664 = vadd.f32 %v555, %v663
        %v665 = vpop.f32.mrb[0].mxu0
        %v666 = vpop.f32.mrb[0].mxu0
        %v667 = vadd.f32 %v555, %v666
        %v668 = vpop.f32.mrb[0].mxu0
        %669 = vmatprep.mubr.bf16.mxu0 0
        %670 = vmatmul.mubr.bf16.gmra.mrb[0].mxu0 %v530
        %v671 = vpop.f32.mrb[0].mxu0
        %v672 = vadd.f32 %v555, %v671
        %v673 = vpop.f32.mrb[0].mxu0
        %v674 = vpop.f32.mrb[0].mxu0
        %v675 = vadd.f32 %v555, %v674
        %v676 = vpop.f32.mrb[0].mxu0
        %677 = vmatprep.mubr.bf16.mxu0 0
        %678 = vmatmul.mubr.bf16.gmra.mrb[0].mxu0 %v531
        %v679 = vpop.f32.mrb[0].mxu0
        %v680 = vadd.f32 %v555, %v679
        %v681 = vpop.f32.mrb[0].mxu0
        %v682 = vpop.f32.mrb[0].mxu0
        %v683 = vadd.f32 %v555, %v682
        %v684 = vpop.f32.mrb[0].mxu0
        %685 = vmatprep.mubr.bf16.mxu0 0
        %686 = vmatmul.mubr.bf16.gmra.mrb[0].mxu0 %v532
        %v687 = vpop.f32.mrb[0].mxu0
        %v688 = vadd.f32 %v555, %v687
        %v689 = vpop.f32.mrb[0].mxu0
        %v690 = vpop.f32.mrb[0].mxu0
        %v691 = vadd.f32 %v555, %v690
        %v692 = vpop.f32.mrb[0].mxu0
        %693 = vmatprep.mubr.bf16.mxu0 0
        %694 = vmatmul.mubr.bf16.gmra.mrb[0].mxu0 %v533
        %v695 = vpop.f32.mrb[0].mxu0
        %v696 = vadd.f32 %v555, %v695
        %v697 = vpop.f32.mrb[0].mxu0
        %v698 = vpop.f32.mrb[0].mxu0
        %v699 = vadd.f32 %v555, %v698
        %v700 = vpop.f32.mrb[0].mxu0
        %701 = vdwg.mxu0
        %v702 = vmax.f32 %v640, 0.0
        %v703 = vmax.f32 %v643, 0.0
        %v704 = vmax.f32 %v648, 0.0
        %v705 = vmax.f32 %v651, 0.0
        %v706 = vmax.f32 %v656, 0.0
        %v707 = vmax.f32 %v659, 0.0
        %v708 = vmax.f32 %v664, 0.0
        %v709 = vmax.f32 %v667, 0.0
        %v710 = vmax.f32 %v672, 0.0
        %v711 = vmax.f32 %v675, 0.0
        %v712 = vmax.f32 %v680, 0.0
        %v713 = vmax.f32 %v683, 0.0
        %v714 = vmax.f32 %v688, 0.0
        %v715 = vmax.f32 %v691, 0.0
        %v716 = vmax.f32 %v696, 0.0
        %v717 = vmax.f32 %v699, 0.0
        %v718 = vpack.c.bf16 %v703, %v702
        %v719 = vpack.c.bf16 %v705, %v704
        %v720 = vpack.c.bf16 %v707, %v706
        %v721 = vpack.c.bf16 %v709, %v708
        %v722 = vpack.c.bf16 %v711, %v710
        %v723 = vpack.c.bf16 %v713, %v712
        %v724 = vpack.c.bf16 %v715, %v714
        %v725 = vpack.c.bf16 %v717, %v716
        %v726 = vld [vmem:[%s5] sm:$0xf]
        %v727 = vld [vmem:[%s5 + $0x4] sm:$0xf]
        %v728 = vld [vmem:[%s5 + $0x8] sm:$0xf]
        %v729 = vld [vmem:[%s5 + $0xc] sm:$0xf]
        %v730 = vld [vmem:[%s5 + $0x10] sm:$0xf]
        %v731 = vld [vmem:[%s5 + $0x14] sm:$0xf]
        %v732 = vld [vmem:[%s5 + $0x18] sm:$0xf]
        %v733 = vld [vmem:[%s5 + $0x1c] sm:$0xf]
        %v734 = vld [vmem:[%s5 + $0x20] sm:$0xf]
        %v735 = vld [vmem:[%s5 + $0x24] sm:$0xf]
        %v736 = vld [vmem:[%s5 + $0x28] sm:$0xf]
        %v737 = vld [vmem:[%s5 + $0x2c] sm:$0xf]
        %v738 = vld [vmem:[%s5 + $0x30] sm:$0xf]
        %v739 = vld [vmem:[%s5 + $0x34] sm:$0xf]
        %v740 = vld [vmem:[%s5 + $0x38] sm:$0xf]
        %v741 = vld [vmem:[%s5 + $0x3c] sm:$0xf]
        %v742 = vld [vmem:[%s6] sm:$0x1]
        %v744 = vlaneseq
        %v745 = vshrl.u32 %v744, 7
        %v746 = vsub.s32 0, %v745
        %v747 = vrot.slane %v742, %v746
        %v765 = vunpack.c.l.b16 %v726
        %v766 = vunpack.c.l.b16 %v727
        %v767 = vunpack.c.l.b16 %v728
        %v768 = vunpack.c.l.b16 %v729
        %v769 = vunpack.c.l.b16 %v730
        %v770 = vunpack.c.l.b16 %v731
        %v771 = vunpack.c.l.b16 %v732
        %v772 = vunpack.c.l.b16 %v733
        %v773 = vunpack.c.l.b16 %v734
        %v774 = vunpack.c.l.b16 %v735
        %v775 = vunpack.c.l.b16 %v736
        %v776 = vunpack.c.l.b16 %v737
        %v777 = vunpack.c.l.b16 %v738
        %v778 = vunpack.c.l.b16 %v739
        %v779 = vunpack.c.l.b16 %v740
        %v780 = vunpack.c.l.b16 %v741
        %v781 = vpack.c.b16 %v766, %v765
        %v782 = vpack.c.b16 %v768, %v767
        %v783 = vpack.c.b16 %v770, %v769
        %v784 = vpack.c.b16 %v772, %v771
        %v785 = vpack.c.b16 %v774, %v773
        %v786 = vpack.c.b16 %v776, %v775
        %v787 = vpack.c.b16 %v778, %v777
        %v788 = vpack.c.b16 %v780, %v779
        %797 = vmatprep.subr.bf16.mxu0 0
        %798 = vmatpush1.bf16.msra.mxu0 %v781
        %799 = vmatprep.subr.bf16.mxu0 0
        %800 = vmatpush1.bf16.msra.mxu0 %v782
        %801 = vmatprep.subr.bf16.mxu0 0
        %802 = vmatpush1.bf16.msra.mxu0 %v783
        %803 = vmatprep.subr.bf16.mxu0 0
        %804 = vmatpush1.bf16.msra.mxu0 %v784
        %805 = vmatprep.subr.bf16.mxu0 0
        %806 = vmatpush1.bf16.msra.mxu0 %v785
        %807 = vmatprep.subr.bf16.mxu0 0
        %808 = vmatpush1.bf16.msra.mxu0 %v786
        %809 = vmatprep.subr.bf16.mxu0 0
        %810 = vmatpush1.bf16.msra.mxu0 %v787
        %811 = vmatprep.subr.bf16.mxu0 0
        %812 = vmatpush1.bf16.msra.mxu0 %v788
        %813 = vmatprep.subr.bf16.mxu0 0
        %814 = vmatpush1.bf16.msra.mxu0 0
        %815 = vmatprep.subr.bf16.mxu0 0
        %816 = vmatpush1.bf16.msra.mxu0 0
        %817 = vmatprep.subr.bf16.mxu0 0
        %818 = vmatpush1.bf16.msra.mxu0 0
        %819 = vmatprep.subr.bf16.mxu0 0
        %820 = vmatpush1.bf16.msra.mxu0 0
        %821 = vmatprep.subr.bf16.mxu0 0
        %822 = vmatpush1.bf16.msra.mxu0 0
        %823 = vmatprep.subr.bf16.mxu0 0
        %824 = vmatpush1.bf16.msra.mxu0 0
        %825 = vmatprep.subr.bf16.mxu0 0
        %826 = vmatpush1.bf16.msra.mxu0 0
        %827 = vmatprep.subr.bf16.mxu0 0
        %828 = vmatpush1.bf16.msra.mxu0 0
        %829 = vmatprep.mubr.bf16.mxu0 0
        %830 = vmatmul.mubr.bf16.gmra.mrb[0].mxu0 %v718
        %v831 = vpop.f32.mrb[0].mxu0
        %v832 = vadd.f32 %v747, %v831
        %v833 = vpop.f32.mrb[0].mxu0
        %v834 = vpop.f32.mrb[0].mxu0
        %v835 = vadd.f32 %v747, %v834
        %v836 = vpop.f32.mrb[0].mxu0
        %837 = vmatprep.mubr.bf16.mxu0 0
        %838 = vmatmul.mubr.bf16.gmra.mrb[0].mxu0 %v719
        %v839 = vpop.f32.mrb[0].mxu0
        %v840 = vadd.f32 %v747, %v839
        %v841 = vpop.f32.mrb[0].mxu0
        %v842 = vpop.f32.mrb[0].mxu0
        %v843 = vadd.f32 %v747, %v842
        %v844 = vpop.f32.mrb[0].mxu0
        %845 = vmatprep.mubr.bf16.mxu0 0
        %846 = vmatmul.mubr.bf16.gmra.mrb[0].mxu0 %v720
        %v847 = vpop.f32.mrb[0].mxu0
        %v848 = vadd.f32 %v747, %v847
        %v849 = vpop.f32.mrb[0].mxu0
        %v850 = vpop.f32.mrb[0].mxu0
        %v851 = vadd.f32 %v747, %v850
        %v852 = vpop.f32.mrb[0].mxu0
        %853 = vmatprep.mubr.bf16.mxu0 0
        %854 = vmatmul.mubr.bf16.gmra.mrb[0].mxu0 %v721
        %v855 = vpop.f32.mrb[0].mxu0
        %v856 = vadd.f32 %v747, %v855
        %v857 = vpop.f32.mrb[0].mxu0
        %v858 = vpop.f32.mrb[0].mxu0
        %v859 = vadd.f32 %v747, %v858
        %v860 = vpop.f32.mrb[0].mxu0
        %861 = vmatprep.mubr.bf16.mxu0 0
        %862 = vmatmul.mubr.bf16.gmra.mrb[0].mxu0 %v722
        %v863 = vpop.f32.mrb[0].mxu0
        %v864 = vadd.f32 %v747, %v863
        %v865 = vpop.f32.mrb[0].mxu0
        %v866 = vpop.f32.mrb[0].mxu0
        %v867 = vadd.f32 %v747, %v866
        %v868 = vpop.f32.mrb[0].mxu0
        %869 = vmatprep.mubr.bf16.mxu0 0
        %870 = vmatmul.mubr.bf16.gmra.mrb[0].mxu0 %v723
        %v871 = vpop.f32.mrb[0].mxu0
        %v872 = vadd.f32 %v747, %v871
        %v873 = vpop.f32.mrb[0].mxu0
        %v874 = vpop.f32.mrb[0].mxu0
        %v875 = vadd.f32 %v747, %v874
        %v876 = vpop.f32.mrb[0].mxu0
        %877 = vmatprep.mubr.bf16.mxu0 0
        %878 = vmatmul.mubr.bf16.gmra.mrb[0].mxu0 %v724
        %v879 = vpop.f32.mrb[0].mxu0
        %v880 = vadd.f32 %v747, %v879
        %v881 = vpop.f32.mrb[0].mxu0
        %v882 = vpop.f32.mrb[0].mxu0
        %v883 = vadd.f32 %v747, %v882
        %v884 = vpop.f32.mrb[0].mxu0
        %885 = vmatprep.mubr.bf16.mxu0 0
        %886 = vmatmul.mubr.bf16.gmra.mrb[0].mxu0 %v725
        %v887 = vpop.f32.mrb[0].mxu0
        %v888 = vadd.f32 %v747, %v887
        %v889 = vpop.f32.mrb[0].mxu0
        %v890 = vpop.f32.mrb[0].mxu0
        %v891 = vadd.f32 %v747, %v890
        %v892 = vpop.f32.mrb[0].mxu0
        %893 = vdwg.mxu0
        %v894 = vmax.f32 %v832, 0.0
        %v895 = vmax.f32 %v835, 0.0
        %v896 = vmax.f32 %v840, 0.0
        %v897 = vmax.f32 %v843, 0.0
        %v898 = vmax.f32 %v848, 0.0
        %v899 = vmax.f32 %v851, 0.0
        %v900 = vmax.f32 %v856, 0.0
        %v901 = vmax.f32 %v859, 0.0
        %v902 = vmax.f32 %v864, 0.0
        %v903 = vmax.f32 %v867, 0.0
        %v904 = vmax.f32 %v872, 0.0
        %v905 = vmax.f32 %v875, 0.0
        %v906 = vmax.f32 %v880, 0.0
        %v907 = vmax.f32 %v883, 0.0
        %v908 = vmax.f32 %v888, 0.0
        %v909 = vmax.f32 %v891, 0.0
        %v910 = vld [vmem:[%s7] sm:$0x1]
        %v912 = vlaneseq
        %v913 = vshrl.u32 %v912, 7
        %v914 = vsub.s32 0, %v913
        %v915 = vrot.slane %v910, %v914
        %v917 = vmul.f32 %v894, %v915
        %v918 = vmul.f32 %v895, %v915
        %v919 = vmul.f32 %v896, %v915
        %v920 = vmul.f32 %v897, %v915
        %v921 = vmul.f32 %v898, %v915
        %v922 = vmul.f32 %v899, %v915
        %v923 = vmul.f32 %v900, %v915
        %v924 = vmul.f32 %v901, %v915
        %v925 = vmul.f32 %v902, %v915
        %v926 = vmul.f32 %v903, %v915
        %v927 = vmul.f32 %v904, %v915
        %v928 = vmul.f32 %v905, %v915
        %v929 = vmul.f32 %v906, %v915
        %v930 = vmul.f32 %v907, %v915
        %v931 = vmul.f32 %v908, %v915
        %v932 = vmul.f32 %v909, %v915
        %933 = vadd.xlane.f32.xlu0 %v917
        %v934 = vpop.xlane.xlu0 %933
        %935 = vadd.xlane.f32.xlu0 %v918
        %v936 = vpop.xlane.xlu0 %935
        %937 = vadd.xlane.f32.xlu0 %v919
        %v938 = vpop.xlane.xlu0 %937
        %939 = vadd.xlane.f32.xlu0 %v920
        %v940 = vpop.xlane.xlu0 %939
        %941 = vadd.xlane.f32.xlu0 %v921
        %v942 = vpop.xlane.xlu0 %941
        %943 = vadd.xlane.f32.xlu0 %v922
        %v944 = vpop.xlane.xlu0 %943
        %945 = vadd.xlane.f32.xlu0 %v923
        %v946 = vpop.xlane.xlu0 %945
        %947 = vadd.xlane.f32.xlu0 %v924
        %v948 = vpop.xlane.xlu0 %947
        %949 = vadd.xlane.f32.xlu0 %v925
        %v950 = vpop.xlane.xlu0 %949
        %951 = vadd.xlane.f32.xlu0 %v926
        %v952 = vpop.xlane.xlu0 %951
        %953 = vadd.xlane.f32.xlu0 %v927
        %v954 = vpop.xlane.xlu0 %953
        %955 = vadd.xlane.f32.xlu0 %v928
        %v956 = vpop.xlane.xlu0 %955
        %957 = vadd.xlane.f32.xlu0 %v929
        %v958 = vpop.xlane.xlu0 %957
        %959 = vadd.xlane.f32.xlu0 %v930
        %v960 = vpop.xlane.xlu0 %959
        %961 = vadd.xlane.f32.xlu0 %v931
        %v962 = vpop.xlane.xlu0 %961
        %963 = vadd.xlane.f32.xlu0 %v932
        %v964 = vpop.xlane.xlu0 %963
        %v965 = vld [vmem:[%s8] sm:$0x1]
        %v967 = vlaneseq
        %v968 = vshrl.u32 %v967, 7
        %v969 = vsub.s32 0, %v968
        %v970 = vrot.slane %v965, %v969
        %972 = vbcast.lane.b32.xlu0 %v970, 256
        %v973 = vpop.permute.xlu0 %972
        %s975 = sor.u32 256, 8
        %976 = vbcast.lane.b32.xlu0 %v970, %s975
        %v977 = vpop.permute.xlu0 %976
        %s979 = sor.u32 256, 16
        %980 = vbcast.lane.b32.xlu0 %v970, %s979
        %v981 = vpop.permute.xlu0 %980
        %s983 = sor.u32 256, 24
        %984 = vbcast.lane.b32.xlu0 %v970, %s983
        %v985 = vpop.permute.xlu0 %984
        %s987 = sor.u32 256, 32
        %988 = vbcast.lane.b32.xlu0 %v970, %s987
        %v989 = vpop.permute.xlu0 %988
        %s991 = sor.u32 256, 40
        %992 = vbcast.lane.b32.xlu0 %v970, %s991
        %v993 = vpop.permute.xlu0 %992
        %s995 = sor.u32 256, 48
        %996 = vbcast.lane.b32.xlu0 %v970, %s995
        %v997 = vpop.permute.xlu0 %996
        %s999 = sor.u32 256, 56
        %1000 = vbcast.lane.b32.xlu0 %v970, %s999
        %v1001 = vpop.permute.xlu0 %1000
        %s1003 = sor.u32 256, 64
        %1004 = vbcast.lane.b32.xlu0 %v970, %s1003
        %v1005 = vpop.permute.xlu0 %1004
        %s1007 = sor.u32 256, 72
        %1008 = vbcast.lane.b32.xlu0 %v970, %s1007
        %v1009 = vpop.permute.xlu0 %1008
        %s1011 = sor.u32 256, 80
        %1012 = vbcast.lane.b32.xlu0 %v970, %s1011
        %v1013 = vpop.permute.xlu0 %1012
        %s1015 = sor.u32 256, 88
        %1016 = vbcast.lane.b32.xlu0 %v970, %s1015
        %v1017 = vpop.permute.xlu0 %1016
        %s1019 = sor.u32 256, 96
        %1020 = vbcast.lane.b32.xlu0 %v970, %s1019
        %v1021 = vpop.permute.xlu0 %1020
        %s1023 = sor.u32 256, 104
        %1024 = vbcast.lane.b32.xlu0 %v970, %s1023
        %v1025 = vpop.permute.xlu0 %1024
        %s1027 = sor.u32 256, 112
        %1028 = vbcast.lane.b32.xlu0 %v970, %s1027
        %v1029 = vpop.permute.xlu0 %1028
        %s1031 = sor.u32 256, 120
        %1032 = vbcast.lane.b32.xlu0 %v970, %s1031
        %v1033 = vpop.permute.xlu0 %1032
        %v1050 = vadd.f32 %v934, %v973
        %v1051 = vadd.f32 %v936, %v977
        %v1052 = vadd.f32 %v938, %v981
        %v1053 = vadd.f32 %v940, %v985
        %v1054 = vadd.f32 %v942, %v989
        %v1055 = vadd.f32 %v944, %v993
        %v1056 = vadd.f32 %v946, %v997
        %v1057 = vadd.f32 %v948, %v1001
        %v1058 = vadd.f32 %v950, %v1005
        %v1059 = vadd.f32 %v952, %v1009
        %v1060 = vadd.f32 %v954, %v1013
        %v1061 = vadd.f32 %v956, %v1017
        %v1062 = vadd.f32 %v958, %v1021
        %v1063 = vadd.f32 %v960, %v1025
        %v1064 = vadd.f32 %v962, %v1029
        %v1065 = vadd.f32 %v964, %v1033
        %1082 = vset.pattern.permute.xlu0 0
        %1083 = vperm.xlu0 %1082, %v1050
        %v1084 = vpop.permute.xlu0 %1083
        %1085 = vset.pattern.permute.xlu0 0
        %1086 = vperm.xlu0 %1085, %v1051
        %v1087 = vpop.permute.xlu0 %1086
        %1088 = vset.pattern.permute.xlu0 0
        %1089 = vperm.xlu0 %1088, %v1052
        %v1090 = vpop.permute.xlu0 %1089
        %1091 = vset.pattern.permute.xlu0 0
        %1092 = vperm.xlu0 %1091, %v1053
        %v1093 = vpop.permute.xlu0 %1092
        %1094 = vset.pattern.permute.xlu0 0
        %1095 = vperm.xlu0 %1094, %v1054
        %v1096 = vpop.permute.xlu0 %1095
        %1097 = vset.pattern.permute.xlu0 0
        %1098 = vperm.xlu0 %1097, %v1055
        %v1099 = vpop.permute.xlu0 %1098
        %1100 = vset.pattern.permute.xlu0 0
        %1101 = vperm.xlu0 %1100, %v1056
        %v1102 = vpop.permute.xlu0 %1101
        %1103 = vset.pattern.permute.xlu0 0
        %1104 = vperm.xlu0 %1103, %v1057
        %v1105 = vpop.permute.xlu0 %1104
        %1106 = vset.pattern.permute.xlu0 0
        %1107 = vperm.xlu0 %1106, %v1058
        %v1108 = vpop.permute.xlu0 %1107
        %1109 = vset.pattern.permute.xlu0 0
        %1110 = vperm.xlu0 %1109, %v1059
        %v1111 = vpop.permute.xlu0 %1110
        %1112 = vset.pattern.permute.xlu0 0
        %1113 = vperm.xlu0 %1112, %v1060
        %v1114 = vpop.permute.xlu0 %1113
        %1115 = vset.pattern.permute.xlu0 0
        %1116 = vperm.xlu0 %1115, %v1061
        %v1117 = vpop.permute.xlu0 %1116
        %1118 = vset.pattern.permute.xlu0 0
        %1119 = vperm.xlu0 %1118, %v1062
        %v1120 = vpop.permute.xlu0 %1119
        %1121 = vset.pattern.permute.xlu0 0
        %1122 = vperm.xlu0 %1121, %v1063
        %v1123 = vpop.permute.xlu0 %1122
        %1124 = vset.pattern.permute.xlu0 0
        %1125 = vperm.xlu0 %1124, %v1064
        %v1126 = vpop.permute.xlu0 %1125
        %1127 = vset.pattern.permute.xlu0 0
        %1128 = vperm.xlu0 %1127, %v1065
        %v1129 = vpop.permute.xlu0 %1128
        %v1130 = vlaneseq
        %v1131 = vand.u32 %v1130, 127
        %v1132 = vlaneseq
        %v1133 = vshrl.u32 %v1132, 7
        %v1134 = vsub.s32 %v1131, %v1133
        %v1135 = vrot.slane %v1084, %v1134
        %v1136 = vadd.s32 %v1131, 4294967288
        %v1137 = vlaneseq
        %v1138 = vshrl.u32 %v1137, 7
        %v1139 = vsub.s32 %v1136, %v1138
        %v1140 = vrot.slane %v1087, %v1139
        %vm1141 = vcmask 130112
        %v1142 = vsel %vm1141, %v1140, %v1135
        %v1143 = vadd.s32 %v1131, 4294967280
        %v1144 = vlaneseq
        %v1145 = vshrl.u32 %v1144, 7
        %v1146 = vsub.s32 %v1143, %v1145
        %v1147 = vrot.slane %v1090, %v1146
        %vm1148 = vcmask 195712
        %v1149 = vsel %vm1148, %v1147, %v1142
        %v1150 = vadd.s32 %v1131, 4294967272
        %v1151 = vlaneseq
        %v1152 = vshrl.u32 %v1151, 7
        %v1153 = vsub.s32 %v1150, %v1152
        %v1154 = vrot.slane %v1093, %v1153
        %vm1155 = vcmask 261312
        %v1156 = vsel %vm1155, %v1154, %v1149
        %v1157 = vadd.s32 %v1131, 4294967264
        %v1158 = vlaneseq
        %v1159 = vshrl.u32 %v1158, 7
        %v1160 = vsub.s32 %v1157, %v1159
        %v1161 = vrot.slane %v1096, %v1160
        %vm1162 = vcmask 326912
        %v1163 = vsel %vm1162, %v1161, %v1156
        %v1164 = vadd.s32 %v1131, 4294967256
        %v1165 = vlaneseq
        %v1166 = vshrl.u32 %v1165, 7
        %v1167 = vsub.s32 %v1164, %v1166
        %v1168 = vrot.slane %v1099, %v1167
        %vm1169 = vcmask 392512
        %v1170 = vsel %vm1169, %v1168, %v1163
        %v1171 = vadd.s32 %v1131, 4294967248
        %v1172 = vlaneseq
        %v1173 = vshrl.u32 %v1172, 7
        %v1174 = vsub.s32 %v1171, %v1173
        %v1175 = vrot.slane %v1102, %v1174
        %vm1176 = vcmask 458112
        %v1177 = vsel %vm1176, %v1175, %v1170
        %v1178 = vadd.s32 %v1131, 4294967240
        %v1179 = vlaneseq
        %v1180 = vshrl.u32 %v1179, 7
        %v1181 = vsub.s32 %v1178, %v1180
        %v1182 = vrot.slane %v1105, %v1181
        %vm1183 = vcmask 523712
        %v1184 = vsel %vm1183, %v1182, %v1177
        %v1185 = vadd.s32 %v1131, 4294967232
        %v1186 = vlaneseq
        %v1187 = vshrl.u32 %v1186, 7
        %v1188 = vsub.s32 %v1185, %v1187
        %v1189 = vrot.slane %v1108, %v1188
        %vm1190 = vcmask 589312
        %v1191 = vsel %vm1190, %v1189, %v1184
        %v1192 = vadd.s32 %v1131, 4294967224
        %v1193 = vlaneseq
        %v1194 = vshrl.u32 %v1193, 7
        %v1195 = vsub.s32 %v1192, %v1194
        %v1196 = vrot.slane %v1111, %v1195
        %vm1197 = vcmask 654912
        %v1198 = vsel %vm1197, %v1196, %v1191
        %v1199 = vadd.s32 %v1131, 4294967216
        %v1200 = vlaneseq
        %v1201 = vshrl.u32 %v1200, 7
        %v1202 = vsub.s32 %v1199, %v1201
        %v1203 = vrot.slane %v1114, %v1202
        %vm1204 = vcmask 720512
        %v1205 = vsel %vm1204, %v1203, %v1198
        %v1206 = vadd.s32 %v1131, 4294967208
        %v1207 = vlaneseq
        %v1208 = vshrl.u32 %v1207, 7
        %v1209 = vsub.s32 %v1206, %v1208
        %v1210 = vrot.slane %v1117, %v1209
        %vm1211 = vcmask 786112
        %v1212 = vsel %vm1211, %v1210, %v1205
        %v1213 = vadd.s32 %v1131, 4294967200
        %v1214 = vlaneseq
        %v1215 = vshrl.u32 %v1214, 7
        %v1216 = vsub.s32 %v1213, %v1215
        %v1217 = vrot.slane %v1120, %v1216
        %vm1218 = vcmask 851712
        %v1219 = vsel %vm1218, %v1217, %v1212
        %v1220 = vadd.s32 %v1131, 4294967192
        %v1221 = vlaneseq
        %v1222 = vshrl.u32 %v1221, 7
        %v1223 = vsub.s32 %v1220, %v1222
        %v1224 = vrot.slane %v1123, %v1223
        %vm1225 = vcmask 917312
        %v1226 = vsel %vm1225, %v1224, %v1219
        %v1227 = vadd.s32 %v1131, 4294967184
        %v1228 = vlaneseq
        %v1229 = vshrl.u32 %v1228, 7
        %v1230 = vsub.s32 %v1227, %v1229
        %v1231 = vrot.slane %v1126, %v1230
        %vm1232 = vcmask 982912
        %v1233 = vsel %vm1232, %v1231, %v1226
        %v1234 = vadd.s32 %v1131, 4294967176
        %v1235 = vlaneseq
        %v1236 = vshrl.u32 %v1235, 7
        %v1237 = vsub.s32 %v1234, %v1236
        %v1238 = vrot.slane %v1129, %v1237
        %vm1239 = vcmask 1048512
        %v1240 = vsel %vm1239, %v1238, %v1233
        %1242 = vst [vmem:[%s325] sm:$0x1] %v1240
        %s1243 = sand.u32 %s225, 1
        %s1244 = scalar_lea.sflag [#allocation3], %s1243
        %s1245 = sand.u32 %s225, 1
        %s1246 = scalar_lea.vmem [#allocation2], %s1245
        // Predicated region
        $region57: #{tpu_custom_call.1} parent=55 // pred_check
          %p1247 = pneg %p235
        $region58: #{tpu_custom_call.1} parent=55 // pred_check_branch
          %1249 = sbr.rel (%p1247) target = $region60
        $region59: #{tpu_custom_call.1} parent=55 // pred_region
          %s1251 = ssub.s32 16, 16
          %1252 = vsyncadd %s1244, %s1251
          %s1253 = smul.addr %s23, 16
          %s1254 = scalar_lea.hbm %s9, %s1253
          %s1256 = sshll.u32 %s1246, 4
          %s1257 = int_to_ptr.vmem [resolvable:$true] %s1256
          %1259 = dma.vmem_to_hbm [thread:$0]  %s1257, 16, %s1254, %s1244
        $region60: #{tpu_custom_call.1} parent=55 // pred_fallthru
          _
      $region56: #{tpu_custom_call.1} parent=5 // pred_fallthru
        _
      %p1260 = scmp.le.s32.totalorder 2, %s18
      // Predicated region
      $region61: #{tpu_custom_call.1} parent=5 // pred_check
        %p1261 = pneg %p1260
      $region62: #{tpu_custom_call.1} parent=5 // pred_check_branch
        %1263 = sbr.rel (%p1261) target = $region64
      $region63: #{tpu_custom_call.1} parent=5 // pred_region
        %s1264 = ssub.s32 %s18, 2
        // Predicated region
        $region65: #{tpu_custom_call.1} parent=63 // pred_check
          %p1265 = pneg %p241
        $region66: #{tpu_custom_call.1} parent=63 // pred_check_branch
          %1267 = sbr.rel (%p1265) target = $region68
        $region67: #{tpu_custom_call.1} parent=63 // pred_region
          %s1268 = sand.u32 %s226, 1
          %s1269 = scalar_lea.sflag [#allocation3], %s1268
          %s1270 = sand.u32 %s226, 1
          %s1271 = scalar_lea.vmem [#allocation2], %s1270
          %1272 = dma.done %s1269, 16
        $region68: #{tpu_custom_call.1} parent=63 // pred_fallthru
          _
      $region64: #{tpu_custom_call.1} parent=5 // pred_fallthru
        _
    $region6: #{tpu_custom_call.1} parent=1 // loop_footer
      %s22 = sadd.s32 1, %s18
    $region7: #{tpu_custom_call.1} parent=1 // loop_footer_branch
      %17 = sbr.rel target = $region3
    $region8: #{tpu_custom_call.1} parent=1 // loop_exit
      _
    %1273 = vsyncpa [#allocation3], 1
    %s1274 = scalar_lea.sflag [#allocation3], 1
    %1275 = vsyncpa %s1274, 1

</llo_original>
